<compile_context>
chip_gen: v7x
topology: tpu7x:2x2x1
jax: 0.10.0
libtpu: 0.0.40
codegen_flags: <defaults>
</compile_context>

<pallas_src>
import math

import jax
import jax.numpy as jnp
from jax import lax
from jax.experimental import pallas as pl
from jax.experimental.pallas import tpu as pltpu


def _round_up(a, b):
    return (a + b - 1) // b * b


# ---------------------------------------------------------------------------
# Pass 1: tiled conv matmul + per-tile BN partial statistics
# ---------------------------------------------------------------------------
def _conv_stats_kernel(p_ref, w_ref, o_ref, s_ref):
    """p_ref: (tm, K), w_ref: (K, Cp), o_ref: (tm, Cp), s_ref: (8, Cp).

    s_ref row 0 = per-tile channel sum, row 1 = per-tile channel sum of
    squares (both taken from the f32 accumulator before any downcast).
    """
    acc = jnp.dot(p_ref[...], w_ref[...], preferred_element_type=jnp.float32)
    o_ref[...] = acc.astype(o_ref.dtype)
    s_ref[0:1, :] = jnp.sum(acc, axis=0, keepdims=True)
    s_ref[1:2, :] = jnp.sum(acc * acc, axis=0, keepdims=True)
    s_ref[2:8, :] = jnp.zeros((6, acc.shape[1]), jnp.float32)


# ---------------------------------------------------------------------------
# Pass 2: fused BN + ReLU + 3x3 / stride-2 max pool over one (n, t) plane
# ---------------------------------------------------------------------------
def _bn_relu_pool_kernel(x_ref, scale_ref, shift_ref, o_ref, wbuf_ref):
    """x_ref: (1, Ho, Wo, Cp) conv plane; scale/shift: (1, Cp) folded BN affine;
    o_ref: (1, PH, PW, Cp); wbuf_ref: (PH, 2*PW, Cp) VMEM scratch.

    Edge handling: post-ReLU values are >= 0, so a clamped duplicate tap
    (low edges) or a zero tap (odd-size high edge) is a no-op under max and
    matches PyTorch's -inf padding semantics.
    """
    _, Ho, Wo, Cp = x_ref.shape
    _, PH, PW, _ = o_ref.shape

    sc = scale_ref[...].reshape(1, 1, Cp)
    sh = shift_ref[...].reshape(1, 1, Cp)
    y = jnp.maximum(x_ref[0].astype(jnp.float32) * sc + sh, 0.0)   # (Ho, Wo, Cp)

    # ---- H direction: window 3 / stride 2 / pad 1 via even/odd row split ----
    if 2 * PH > Ho:                        # odd Ho: duplicate last row (clamp tap)
        y = jnp.concatenate([y, y[Ho - 1:Ho]], axis=0)
    yr = y.reshape(PH, 2, Wo, Cp)          # outer-dim split: no data movement
    even = yr[:, 0]                        # rows 2*ph      (window centers)
    odd = yr[:, 1]                         # rows 2*ph + 1
    if PH > 1:
        up = jnp.concatenate([even[:1], odd[:PH - 1]], axis=0)    # rows 2*ph - 1
    else:
        up = even[:1]
    hmax = jnp.maximum(jnp.maximum(even, odd), up)                 # (PH, Wo, Cp)

    # ---- W direction: window 3 / stride 2 / pad 1 via strided scratch reads ----
    wbuf_ref[:, 0:Wo, :] = hmax
    if 2 * PW > Wo:                        # odd Wo: zero tail column (>=0 => safe)
        wbuf_ref[:, Wo:2 * PW, :] = jnp.zeros((PH, 2 * PW - Wo, Cp), jnp.float32)
    c = wbuf_ref[:, pl.ds(0, PW, stride=2), :]                     # cols 2*pw
    d = wbuf_ref[:, pl.ds(1, PW, stride=2), :]                     # cols 2*pw + 1
    if PW > 1:
        u = jnp.concatenate([c[:, :1], d[:, :PW - 1]], axis=1)     # cols 2*pw - 1
    else:
        u = c[:, :1]
    o_ref[0] = jnp.maximum(jnp.maximum(c, d), u)


# ---------------------------------------------------------------------------
# Wrapper
# ---------------------------------------------------------------------------
def resnet_basic_stem(x, w, gamma, beta, *, stride, padding, eps=1e-5,
                      block_m=4096, operand_dtype=jnp.bfloat16,
                      conv_out_dtype=jnp.float32):
    """x: (N, C_in, T, H, W); w: (C_out, C_in, kT, kH, kW).  Returns NCDHW.

    block_m: target conv rows (of M = N*To*Ho*Wo) per pass-1 tile; rounded to a
      whole number of (n, t) planes.  ~4096 is safe on v5e/v6e/v7x with bf16
      operands (vmem_limit_bytes is set explicitly below).
    operand_dtype: dtype of the DMA'd matmul operands (bf16 halves the dominant
      HBM stream and doubles MXU peak on v6e/v7x; accumulation stays f32).
    conv_out_dtype: storage dtype of the conv activation between the passes
      (bf16 halves that stream too; BN stats are taken before the downcast).
    """
    N, Cin, T, H, W = x.shape
    Cout, _, kT, kH, kW = w.shape
    st, sh_, sw = stride
    pt, ph_, pw_ = padding

    To = (T + 2 * pt - kT) // st + 1
    Ho = (H + 2 * ph_ - kH) // sh_ + 1
    Wo = (W + 2 * pw_ - kW) // sw + 1
    NT = N * To
    plane = Ho * Wo
    M = NT * plane
    K = Cin * kT * kH * kW
    Cp = _round_up(Cout, 128)

    opb = jnp.dtype(operand_dtype).itemsize
    cob = jnp.dtype(conv_out_dtype).itemsize

    # Pass-1 tile = q whole (n, t) planes; q rounded so tm satisfies the
    # (8, x) sublane constraint (16 when operands pack two per 32-bit word).
    sub = 16 if opb < 4 else 8
    q = max(1, min(block_m // plane if plane <= block_m else 1, NT))
    q = _round_up(q, sub // math.gcd(plane, sub))
    tm = q * plane
    n_tiles = -(-NT // q)
    NTp = n_tiles * q
    Mp = NTp * plane

    # ---------------- im2col (plain-JAX glue, bf16 from the start) ----------------
    # TODO(synk): replace with in-kernel tap accumulation to remove this HBM blow-up.
    x_pad = jnp.pad(x, ((0, 0), (0, 0), (pt, pt), (ph_, ph_), (pw_, pw_)))
    x_pad = x_pad.astype(operand_dtype)
    taps = []
    for kt_ in range(kT):
        for kh_ in range(kH):
            for kw_ in range(kW):
                taps.append(x_pad[:, :,
                                  kt_:kt_ + (To - 1) * st + 1:st,
                                  kh_:kh_ + (Ho - 1) * sh_ + 1:sh_,
                                  kw_:kw_ + (Wo - 1) * sw + 1:sw])
    p = jnp.stack(taps, axis=0)                      # (Ktaps, N, Cin, To, Ho, Wo)
    p = jnp.transpose(p, (1, 3, 4, 5, 2, 0))         # (N, To, Ho, Wo, Cin, Ktaps)
    patches = p.reshape(M, K)
    patches = jnp.pad(patches, ((0, Mp - M), (0, 0)))        # zero rows: 0 to stats
    w_mat = w.reshape(Cout, K).T.astype(operand_dtype)       # (K, Cout)
    w_mat = jnp.pad(w_mat, ((0, 0), (0, Cp - Cout)))
    gamma_p = jnp.pad(gamma.astype(jnp.float32), (0, Cp - Cout))   # padded gamma = 0
    beta_p = jnp.pad(beta.astype(jnp.float32), (0, Cp - Cout))     # padded beta  = 0

    vmem1 = int(max(2 * (tm * K * opb + tm * Cp * cob + 8 * Cp * 4)
                    + 2 * K * Cp * opb + (4 << 20), 32 << 20))
    cost1 = pl.CostEstimate(
        flops=2 * Mp * K * Cp, transcendentals=0,
        bytes_accessed=Mp * K * opb + K * Cp * opb + Mp * Cp * cob
        + n_tiles * 8 * Cp * 4)

    conv_out, stats = pl.pallas_call(
        _conv_stats_kernel,
        out_shape=(jax.ShapeDtypeStruct((Mp, Cp), conv_out_dtype),
                   jax.ShapeDtypeStruct((n_tiles * 8, Cp), jnp.float32)),
        grid=(n_tiles,),
        in_specs=[pl.BlockSpec((tm, K), lambda i: (i, 0)),
                  pl.BlockSpec((K, Cp), lambda i: (0, 0))],
        out_specs=(pl.BlockSpec((tm, Cp), lambda i: (i, 0)),
                   pl.BlockSpec((8, Cp), lambda i: (i, 0))),
        compiler_params=pltpu.CompilerParams(
            dimension_semantics=("parallel",), vmem_limit_bytes=vmem1),
        cost_estimate=cost1,
    )(patches, w_mat)

    # ------ fold batch statistics into a per-channel affine (tiny glue) ------
    stats = stats.reshape(n_tiles, 8, Cp)
    ch_sum = jnp.sum(stats[:, 0, :], axis=0)
    ch_sq = jnp.sum(stats[:, 1, :], axis=0)
    mean = ch_sum / M
    var = jnp.maximum(ch_sq / M - mean * mean, 0.0)          # biased variance
    inv = lax.rsqrt(var + eps)
    scale = (gamma_p * inv).reshape(1, Cp)                   # padded channels -> 0
    shift = (beta_p - mean * gamma_p * inv).reshape(1, Cp)

    # Leading-dim split only: a free bitcast, never a strip-padding copy.
    conv4d = conv_out.reshape(NTp, Ho, Wo, Cp)

    # ------- Pass 2: BN + ReLU + MaxPool3d([1,3,3], [1,2,2], [0,1,1]) -------
    PH = (Ho - 1) // 2 + 1
    PW = (Wo - 1) // 2 + 1

    vmem2 = int(max(2 * (plane * Cp * cob + PH * PW * Cp * 4 + 2 * Cp * 4)
                    + PH * 2 * PW * Cp * 4 + (4 << 20), 32 << 20))
    cost2 = pl.CostEstimate(
        flops=8 * NT * plane * Cp, transcendentals=0,
        bytes_accessed=NT * (plane * Cp * cob + PH * PW * Cp * 4) + 2 * Cp * 4)

    pooled = pl.pallas_call(
        _bn_relu_pool_kernel,
        out_shape=jax.ShapeDtypeStruct((NT, PH, PW, Cp), jnp.float32),
        grid=(NT,),
        in_specs=[pl.BlockSpec((1, Ho, Wo, Cp), lambda nt: (nt, 0, 0, 0)),
                  pl.BlockSpec((1, Cp), lambda nt: (0, 0)),
                  pl.BlockSpec((1, Cp), lambda nt: (0, 0))],
        out_specs=pl.BlockSpec((1, PH, PW, Cp), lambda nt: (nt, 0, 0, 0)),
        scratch_shapes=[pltpu.VMEM((PH, 2 * PW, Cp), jnp.float32)],
        compiler_params=pltpu.CompilerParams(
            dimension_semantics=("parallel",), vmem_limit_bytes=vmem2),
        cost_estimate=cost2,
    )(conv4d, scale, shift)

    # NCDHW to match the PyTorch module (slice + transpose are output-sized glue).
    out = pooled[..., :Cout].reshape(N, To, PH, PW, Cout)
    return jnp.transpose(out, (0, 4, 1, 2, 3))


if __name__ == "__main__":
    N, Cin, T, H, W = 2, 3, 4, 16, 16
    Cout = 8
    kernel = (1, 7, 7)       # classic Slow-pathway stem
    stride = (1, 2, 2)
    padding = (0, 3, 3)
    eps = 1e-5

    key = jax.random.PRNGKey(0)
    kx, kw = jax.random.split(key)
    x = jax.random.normal(kx, (N, Cin, T, H, W), jnp.float32)
    w = jax.random.normal(kw, (Cout, Cin) + kernel, jnp.float32) * 0.1
    gamma = 1.0 + 0.1 * jnp.arange(Cout, dtype=jnp.float32)
    beta = 0.05 * jnp.arange(Cout, dtype=jnp.float32)

    # pure-JAX reference (training-mode BatchNorm forward, like a fresh module)
    conv = lax.conv_general_dilated(
        x, w, window_strides=stride,
        padding=[(p, p) for p in padding],
        dimension_numbers=('NCDHW', 'OIDHW', 'NCDHW'))
    mean = conv.mean(axis=(0, 2, 3, 4), keepdims=True)
    var = jnp.square(conv - mean).mean(axis=(0, 2, 3, 4), keepdims=True)
    yref = (conv - mean) * lax.rsqrt(var + eps)
    yref = yref * gamma.reshape(1, Cout, 1, 1, 1) + beta.reshape(1, Cout, 1, 1, 1)
    yref = jnp.maximum(yref, 0.0)
    ref = lax.reduce_window(yref, -jnp.inf, lax.max,
                            (1, 1, 1, 3, 3), (1, 1, 1, 2, 2),
                            [(0, 0), (0, 0), (0, 0), (1, 1), (1, 1)])

    # 1) f32 path; block_m=192 -> 3 (n,t) planes per tile, which exercises the
    #    padded-plane (Mp > M) path and the BN stats over partial tiles.
    out_f32 = jax.block_until_ready(
        resnet_basic_stem(x, w, gamma, beta, stride=stride, padding=padding,
                          eps=eps, block_m=192,
                          operand_dtype=jnp.float32,
                          conv_out_dtype=jnp.float32))
    assert out_f32.shape == ref.shape, (out_f32.shape, ref.shape)
    err = float(jnp.max(jnp.abs(out_f32 - ref)))
    assert jnp.allclose(out_f32, ref, atol=3e-2, rtol=3e-2), err

    # 2) default fast path: bf16 matmul operands, f32 conv activation.
    out_bf16 = jax.block_until_ready(
        resnet_basic_stem(x, w, gamma, beta, stride=stride, padding=padding,
                          eps=eps, block_m=128))
    err_bf16 = float(jnp.max(jnp.abs(out_bf16 - ref)))
    assert jnp.allclose(out_bf16, ref, atol=1e-1, rtol=5e-2), err_bf16

    # 3) bf16 conv activation between the passes (halves inter-pass HBM bytes).
    out_bf16c = jax.block_until_ready(
        resnet_basic_stem(x, w, gamma, beta, stride=stride, padding=padding,
                          eps=eps, block_m=128, conv_out_dtype=jnp.bfloat16))
    err_bf16c = float(jnp.max(jnp.abs(out_bf16c - ref)))
    assert jnp.allclose(out_bf16c, ref, atol=1e-1, rtol=5e-2), err_bf16c

    print("KERNEL_OK")
</pallas_src>

<mosaic_0001>
module attributes {stable_mosaic.version = 11 : i64} {
  func.func @_conv_stats_kernel(%arg0: i32, %arg1: memref<192x147xf32, #tpu.memory_space<vmem>>, %arg2: memref<147x128xf32, #tpu.memory_space<vmem>>, %arg3: memref<192x128xf32, #tpu.memory_space<vmem>>, %arg4: memref<8x128xf32, #tpu.memory_space<vmem>>) attributes {dimension_semantics = [#tpu.dimension_semantics<parallel>], iteration_bounds = array<i64: 3>, scalar_prefetch = 0 : i64, scratch_operands = 0 : i64, tpu.core_type = #tpu.core_type<tc>, window_params = [{transform_indices = @transform_0, window_bounds = array<i64: 192, 147>}, {pipeline_mode = #tpu.pipeline_mode<synchronous>, transform_indices = @transform_1, window_bounds = array<i64: 147, 128>}, {transform_indices = @transform_2, window_bounds = array<i64: 192, 128>}, {transform_indices = @transform_3, window_bounds = array<i64: 8, 128>}]} {
    %c0 = arith.constant 0 : index
    %c0_0 = arith.constant 0 : index
    %0 = vector.load %arg1[%c0, %c0_0] : memref<192x147xf32, #tpu.memory_space<vmem>>, vector<192x147xf32>
    %c0_1 = arith.constant 0 : index
    %c0_2 = arith.constant 0 : index
    %1 = vector.load %arg2[%c0_1, %c0_2] : memref<147x128xf32, #tpu.memory_space<vmem>>, vector<147x128xf32>
    %cst = arith.constant dense<0.000000e+00> : vector<192x128xf32>
    %2 = tpu.matmul %0, %1, %cst {dimension_numbers = #tpu.dot_dimension_numbers<[1], [0], [0], [1], [0, 0, 1, 1], [], []>} : vector<192x147xf32>, vector<147x128xf32>, vector<192x128xf32> -> vector<192x128xf32>
    %c0_3 = arith.constant 0 : index
    %c0_4 = arith.constant 0 : index
    %3 = vector.load %arg3[%c0_3, %c0_4] : memref<192x128xf32, #tpu.memory_space<vmem>>, vector<192x128xf32>
    tpu.vector_store %arg3[%c0_3, %c0_4], %2 {strides = array<i32>} : memref<192x128xf32, #tpu.memory_space<vmem>>, vector<192x128xf32>,
    %cst_5 = arith.constant dense<0.000000e+00> : vector<128xf32>
    %4 = vector.multi_reduction <add>, %2, %cst_5 [0] : vector<192x128xf32> to vector<128xf32>
    %5 = vector.shape_cast %4 : vector<128xf32> to vector<1x128xf32>
    %c0_6 = arith.constant 0 : index
    %c0_7 = arith.constant 0 : index
    %6 = vector.load %arg4[%c0_6, %c0_7] : memref<8x128xf32, #tpu.memory_space<vmem>>, vector<1x128xf32>
    tpu.vector_store %arg4[%c0_6, %c0_7], %5 {strides = array<i32>} : memref<8x128xf32, #tpu.memory_space<vmem>>, vector<1x128xf32>,
    %7 = arith.mulf %2, %2 : vector<192x128xf32>
    %cst_8 = arith.constant dense<0.000000e+00> : vector<128xf32>
    %8 = vector.multi_reduction <add>, %7, %cst_8 [0] : vector<192x128xf32> to vector<128xf32>
    %9 = vector.shape_cast %8 : vector<128xf32> to vector<1x128xf32>
    %c1 = arith.constant 1 : index
    %c0_9 = arith.constant 0 : index
    %10 = vector.load %arg4[%c1, %c0_9] : memref<8x128xf32, #tpu.memory_space<vmem>>, vector<1x128xf32>
    tpu.vector_store %arg4[%c1, %c0_9], %9 {strides = array<i32>} : memref<8x128xf32, #tpu.memory_space<vmem>>, vector<1x128xf32>,
    %cst_10 = arith.constant 0.000000e+00 : f32
    %11 = vector.broadcast %cst_10 : f32 to vector<6x128xf32>
    %c2 = arith.constant 2 : index
    %c0_11 = arith.constant 0 : index
    %12 = vector.load %arg4[%c2, %c0_11] : memref<8x128xf32, #tpu.memory_space<vmem>>, vector<6x128xf32>
    tpu.vector_store %arg4[%c2, %c0_11], %11 {strides = array<i32>} : memref<8x128xf32, #tpu.memory_space<vmem>>, vector<6x128xf32>,
    return
  }
  func.func @transform_0(%arg0: i32) -> (i32, i32) {
    %c0_i32 = arith.constant 0 : i32
    %c0_i32_0 = arith.constant 0 : i32
    return %arg0, %c0_i32 : i32, i32
  }
  func.func @transform_1(%arg0: i32) -> (i32, i32) {
    %c0_i32 = arith.constant 0 : i32
    %c0_i32_0 = arith.constant 0 : i32
    %c0_i32_1 = arith.constant 0 : i32
    return %c0_i32, %c0_i32_0 : i32, i32
  }
  func.func @transform_2(%arg0: i32) -> (i32, i32) {
    %c0_i32 = arith.constant 0 : i32
    %c0_i32_0 = arith.constant 0 : i32
    return %arg0, %c0_i32 : i32, i32
  }
  func.func @transform_3(%arg0: i32) -> (i32, i32) {
    %c0_i32 = arith.constant 0 : i32
    %c0_i32_0 = arith.constant 0 : i32
    return %arg0, %c0_i32 : i32, i32
  }
}

</mosaic_0001>

<llo_original>
// kernel: tpu_custom_call.1
$region0: #{tpu_custom_call.1}
  #allocation0 [shape = 'u32[]', space=smem, size = 0x4, offset = 0x4, fixed_abs, tag = 'smem constant byte address 0x4 - core index']
  #allocation1 [shape = 'u32[144,128]{1,0:T(1,128)}', space=vmem, size = 0x12000, scoped, tag = 'internal scratch']
  %s0 = inlined_call_operand.vmem [shape: f32[576,147], index: 0, kind: input, shape index: {}]
  %s1 = inlined_call_operand.vmem [shape: f32[147,128], index: 1, kind: input, shape index: {}]
  %s2 = inlined_call_operand.hbm [shape: f32[576,128], index: 2, kind: output, shape index: {0}]
  %s3 = inlined_call_operand.hbm [shape: f32[24,128], index: 3, kind: output, shape index: {1}]
  %4 = xla_tuple %s2, %s3
  %s5 = sld [smem:[#allocation0]]
  $region49: #{tpu_custom_call.1} parent=0
    _
  %s7 = ssub.s32 1, %s5
  %s8 = scalar_select 0, %s7, %s5
  $region1: #{tpu_custom_call.1} parent=0
    #allocation2 [shape = 'u8[196608]{0}', space=vmem, size = 0x30000, scoped, tag = 'output window, operand 0']
    #allocation3 [shape = 's32[2]{0}', space=sflag, size = 0x8, scoped, tag = 'scoped memory for tpu_custom_call.1']
    #allocation4 [shape = 'u8[8192]{0}', space=vmem, size = 0x2000, scoped, tag = 'output window, operand 1']
    #allocation5 [shape = 's32[2]{0}', space=sflag, size = 0x8, scoped, tag = 'scoped memory for tpu_custom_call.1']
    %9 = vsyncpa [#allocation3], 0
    %s10 = scalar_lea.sflag [#allocation3], 1
    %11 = vsyncpa %s10, 0
    %12 = vsyncpa [#allocation5], 0
    %s13 = scalar_lea.sflag [#allocation5], 1
    %14 = vsyncpa %s13, 0
    loop: start=0, step=1, limit=5
    $region2: #{tpu_custom_call.1} parent=1 // loop_pre_header
      _
    $region3: #{tpu_custom_call.1} parent=1 // loop_header
      %s16 = sphi 0, %s20
      %p17 = scmp.ge.s32.totalorder %s16, 5
      %s26 = sphi 0, %s28
      %s29 = sphi 0, %s26
      %s30 = sphi 0, %s29
      %s46 = sphi 0, %s30
      %s50 = sphi 0, %s50
      %s52 = sphi 0, %s50
      %s53 = sphi 0, %s52
      %s67 = sphi 0, %s53
      %s73 = sphi 0, %s75
      %s76 = sphi 0, %s73
      %s77 = sphi 0, %s76
      %s93 = sphi 0, %s77
      %s99 = sphi 0, %s101
      %s102 = sphi 0, %s99
      %s103 = sphi 0, %s102
      %s119 = sphi 0, %s103
    $region4: #{tpu_custom_call.1} parent=1 // loop_header_branch
      %19 = sbr.rel (%p17) target = $region8
    $region5: #{tpu_custom_call.1} parent=1 // loop_body
      %s21 = ssub.s32 %s16, 1
      %s22 = ssub.s32 %s16, 2
      %s23 = sadd.s32 %s16, 1
      %s24 = ssub.s32 %s16, %s23
      %p25 = scmp.eq.s32.totalorder %s24, 0
      %s27 = sadd.s32 %s26, 1
      %s28 = scalar_select %p25, %s26, %s27
      %p31 = pneg %p25
      %p32 = scmp.eq.s32.totalorder %s16, 2
      %p33 = por %p31, %p32
      %p34 = scmp.ne.s32.totalorder %s26, %s29
      %p35 = scmp.eq.s32.totalorder %s16, 0
      %p36 = por %p34, %p35
      %p37 = scmp.ne.s32.totalorder %s26, %s29
      %p38 = scmp.eq.s32.totalorder %s21, 2
      %p39 = por %p37, %p38
      %p40 = scmp.ne.s32.totalorder %s29, %s30
      %p41 = scmp.eq.s32.totalorder %s21, 0
      %p42 = por %p40, %p41
      %p43 = scmp.ne.s32.totalorder %s29, %s30
      %p44 = scmp.eq.s32.totalorder %s22, 2
      %p45 = por %p43, %p44
      %p47 = scmp.ne.s32.totalorder %s30, %s46
      %p48 = scmp.eq.s32.totalorder %s22, 0
      %p49 = por %p47, %p48
      %s51 = sadd.s32 %s50, 1
      %p54 = scmp.eq.s32.totalorder %s16, 2
      %p55 = scmp.ne.s32.totalorder %s50, %s52
      %p56 = scmp.eq.s32.totalorder %s16, 0
      %p57 = por %p55, %p56
      %p58 = scmp.ne.s32.totalorder %s50, %s52
      %p59 = scmp.eq.s32.totalorder %s21, 2
      %p60 = por %p58, %p59
      %p61 = scmp.ne.s32.totalorder %s52, %s53
      %p62 = scmp.eq.s32.totalorder %s21, 0
      %p63 = por %p61, %p62
      %p64 = scmp.ne.s32.totalorder %s52, %s53
      %p65 = scmp.eq.s32.totalorder %s22, 2
      %p66 = por %p64, %p65
      %p68 = scmp.ne.s32.totalorder %s53, %s67
      %p69 = scmp.eq.s32.totalorder %s22, 0
      %p70 = por %p68, %p69
      %s71 = ssub.s32 %s16, %s23
      %p72 = scmp.eq.s32.totalorder %s71, 0
      %s74 = sadd.s32 %s73, 1
      %s75 = scalar_select %p72, %s73, %s74
      %p78 = pneg %p72
      %p79 = scmp.eq.s32.totalorder %s16, 2
      %p80 = por %p78, %p79
      %p81 = scmp.ne.s32.totalorder %s73, %s76
      %p82 = scmp.eq.s32.totalorder %s16, 0
      %p83 = por %p81, %p82
      %p84 = scmp.ne.s32.totalorder %s73, %s76
      %p85 = scmp.eq.s32.totalorder %s21, 2
      %p86 = por %p84, %p85
      %p87 = scmp.ne.s32.totalorder %s76, %s77
      %p88 = scmp.eq.s32.totalorder %s21, 0
      %p89 = por %p87, %p88
      %p90 = scmp.ne.s32.totalorder %s76, %s77
      %p91 = scmp.eq.s32.totalorder %s22, 2
      %p92 = por %p90, %p91
      %p94 = scmp.ne.s32.totalorder %s77, %s93
      %p95 = scmp.eq.s32.totalorder %s22, 0
      %p96 = por %p94, %p95
      %s97 = ssub.s32 %s16, %s23
      %p98 = scmp.eq.s32.totalorder %s97, 0
      %s100 = sadd.s32 %s99, 1
      %s101 = scalar_select %p98, %s99, %s100
      %p104 = pneg %p98
      %p105 = scmp.eq.s32.totalorder %s16, 2
      %p106 = por %p104, %p105
      %p107 = scmp.ne.s32.totalorder %s99, %s102
      %p108 = scmp.eq.s32.totalorder %s16, 0
      %p109 = por %p107, %p108
      %p110 = scmp.ne.s32.totalorder %s99, %s102
      %p111 = scmp.eq.s32.totalorder %s21, 2
      %p112 = por %p110, %p111
      %p113 = scmp.ne.s32.totalorder %s102, %s103
      %p114 = scmp.eq.s32.totalorder %s21, 0
      %p115 = por %p113, %p114
      %p116 = scmp.ne.s32.totalorder %s102, %s103
      %p117 = scmp.eq.s32.totalorder %s22, 2
      %p118 = por %p116, %p117
      %p120 = scmp.ne.s32.totalorder %s103, %s119
      %p121 = scmp.eq.s32.totalorder %s22, 0
      %p122 = por %p120, %p121
      %p123 = scmp.le.s32.totalorder 1, %s16
      %p124 = scmp.lt.s32.totalorder %s16, 4
      %p125 = pnand %p123, %p124
      %p126 = pneg %p125
      // Predicated region
      $region9: #{tpu_custom_call.1} parent=5 // pred_check
        _
      $region10: #{tpu_custom_call.1} parent=5 // pred_check_branch
        %128 = sbr.rel (%p125) target = $region12
      $region11: #{tpu_custom_call.1} parent=5 // pred_region
        %s129 = ssub.s32 %s16, 1
        // Predicated region
        $region13: #{tpu_custom_call.1} parent=11 // pred_check
          %p130 = pneg %p63
        $region14: #{tpu_custom_call.1} parent=11 // pred_check_branch
          %132 = sbr.rel (%p130) target = $region16
        $region15: #{tpu_custom_call.1} parent=11 // pred_region
          _
        $region16: #{tpu_custom_call.1} parent=11 // pred_fallthru
          _
      $region12: #{tpu_custom_call.1} parent=5 // pred_fallthru
        _
      %p133 = scmp.lt.s32.totalorder %s16, 3
      // Predicated region
      $region17: #{tpu_custom_call.1} parent=5 // pred_check
        %p134 = pneg %p133
      $region18: #{tpu_custom_call.1} parent=5 // pred_check_branch
        %136 = sbr.rel (%p134) target = $region20
      $region19: #{tpu_custom_call.1} parent=5 // pred_region
        // Predicated region
        $region21: #{tpu_custom_call.1} parent=19 // pred_check
          %p137 = pneg %p36
        $region22: #{tpu_custom_call.1} parent=19 // pred_check_branch
          %139 = sbr.rel (%p137) target = $region24
        $region23: #{tpu_custom_call.1} parent=19 // pred_region
          %s140 = smul.u32 24, %s16
          %p141 = scmp.lt.s32.totalorder %s140, 71
          %s142 = scalar_select %p141, %s140, 71
          %s143 = smul.addr %s142, 2
          %s144 = smul.addr %s143, 8
          %s145 = scalar_lea.vmem %s0, %s144
          %s146 = smul.u32 24, %s16
        $region24: #{tpu_custom_call.1} parent=19 // pred_fallthru
          _
      $region20: #{tpu_custom_call.1} parent=5 // pred_fallthru
        _
      %p147 = scmp.le.s32.totalorder 1, %s16
      %p148 = scmp.lt.s32.totalorder %s16, 4
      %p149 = pnand %p147, %p148
      %p150 = pneg %p149
      // Predicated region
      $region25: #{tpu_custom_call.1} parent=5 // pred_check
        _
      $region26: #{tpu_custom_call.1} parent=5 // pred_check_branch
        %152 = sbr.rel (%p149) target = $region28
      $region27: #{tpu_custom_call.1} parent=5 // pred_region
        %s153 = ssub.s32 %s16, 1
        %s154 = smul.u32 24, %s21
        %p155 = scmp.lt.s32.totalorder %s154, 71
        %s156 = scalar_select %p155, %s154, 71
        %s157 = smul.addr %s156, 2
        %s158 = smul.addr %s157, 8
        %s159 = scalar_lea.vmem %s0, %s158
        %p160 = pneg %p42
        %p161 = pneg %p39
        %p162 = pneg %p63
        %p163 = pneg %p60
        %p164 = pneg %p89
        %p165 = pneg %p86
        %s166 = sand.u32 %s76, 1
        %s167 = scalar_lea.sflag [#allocation3], %s166
        %s168 = sand.u32 %s76, 1
        %s169 = smul.addr %s168, 192
        %s170 = scalar_lea.vmem [#allocation2], %s169
        %p171 = pneg %p115
        %p172 = pneg %p112
        %s173 = sand.u32 %s102, 1
        %s174 = scalar_lea.sflag [#allocation5], %s173
        %s175 = sand.u32 %s102, 1
        %s176 = smul.addr %s175, 8
        %s177 = scalar_lea.vmem [#allocation4], %s176
        %s178 = smul.u32 24, %s21
        %p179 = scmp.lt.s32.totalorder %s178, 71
        %s180 = scalar_select %p179, %s178, 71
        %s181 = smul.addr %s180, 2
        %s182 = smul.addr %s181, 8
        %s183 = scalar_lea.vmem %s0, %s182
        %s184 = smul.u32 24, %s21
        %s185 = smul.u32 24, %s21
        %v186 = vld [vmem:[%s183] sm:$0xff]
        %v187 = vld [vmem:[%s183 + $0x8] sm:$0xff]
        %v188 = vld [vmem:[%s183 + $0x10] sm:$0xff]
        %v189 = vld [vmem:[%s183 + $0x18] sm:$0xff]
        %v190 = vld [vmem:[%s183 + $0x20] sm:$0xff]
        %v191 = vld [vmem:[%s183 + $0x28] sm:$0xff]
        %v192 = vld [vmem:[%s183 + $0x30] sm:$0xff]
        %v193 = vld [vmem:[%s183 + $0x38] sm:$0xff]
        %v194 = vld [vmem:[%s183 + $0x40] sm:$0xff]
        %v195 = vld [vmem:[%s183 + $0x48] sm:$0xff]
        %v196 = vld [vmem:[%s183 + $0x50] sm:$0xff]
        %v197 = vld [vmem:[%s183 + $0x58] sm:$0xff]
        %v198 = vld [vmem:[%s183 + $0x60] sm:$0xff]
        %v199 = vld [vmem:[%s183 + $0x68] sm:$0xff]
        %v200 = vld [vmem:[%s183 + $0x70] sm:$0xff]
        %v201 = vld [vmem:[%s183 + $0x78] sm:$0xff]
        %v202 = vld [vmem:[%s183 + $0x80] sm:$0xff]
        %v203 = vld [vmem:[%s183 + $0x88] sm:$0xff]
        %v204 = vld [vmem:[%s183 + $0x90] sm:$0xff]
        %v205 = vld [vmem:[%s183 + $0x98] sm:$0xff]
        %v206 = vld [vmem:[%s183 + $0xa0] sm:$0xff]
        %v207 = vld [vmem:[%s183 + $0xa8] sm:$0xff]
        %v208 = vld [vmem:[%s183 + $0xb0] sm:$0xff]
        %v209 = vld [vmem:[%s183 + $0xb8] sm:$0xff]
        %v210 = vld [vmem:[%s183 + $0xc0] sm:$0xff]
        %v211 = vld [vmem:[%s183 + $0xc8] sm:$0xff]
        %v212 = vld [vmem:[%s183 + $0xd0] sm:$0xff]
        %v213 = vld [vmem:[%s183 + $0xd8] sm:$0xff]
        %v214 = vld [vmem:[%s183 + $0xe0] sm:$0xff]
        %v215 = vld [vmem:[%s183 + $0xe8] sm:$0xff]
        %v216 = vld [vmem:[%s183 + $0xf0] sm:$0xff]
        %v217 = vld [vmem:[%s183 + $0xf8] sm:$0xff]
        %v218 = vld [vmem:[%s183 + $0x100] sm:$0xff]
        %v219 = vld [vmem:[%s183 + $0x108] sm:$0xff]
        %v220 = vld [vmem:[%s183 + $0x110] sm:$0xff]
        %v221 = vld [vmem:[%s183 + $0x118] sm:$0xff]
        %v222 = vld [vmem:[%s183 + $0x120] sm:$0xff]
        %v223 = vld [vmem:[%s183 + $0x128] sm:$0xff]
        %v224 = vld [vmem:[%s183 + $0x130] sm:$0xff]
        %v225 = vld [vmem:[%s183 + $0x138] sm:$0xff]
        %v226 = vld [vmem:[%s183 + $0x140] sm:$0xff]
        %v227 = vld [vmem:[%s183 + $0x148] sm:$0xff]
        %v228 = vld [vmem:[%s183 + $0x150] sm:$0xff]
        %v229 = vld [vmem:[%s183 + $0x158] sm:$0xff]
        %v230 = vld [vmem:[%s183 + $0x160] sm:$0xff]
        %v231 = vld [vmem:[%s183 + $0x168] sm:$0xff]
        %v232 = vld [vmem:[%s183 + $0x170] sm:$0xff]
        %v233 = vld [vmem:[%s183 + $0x178] sm:$0xff]
        %v234 = vld [vmem:[%s1] sm:$0xff]
        %v235 = vld [vmem:[%s1 + $0x8] sm:$0xff]
        %v236 = vld [vmem:[%s1 + $0x10] sm:$0xff]
        %v237 = vld [vmem:[%s1 + $0x18] sm:$0xff]
        %v238 = vld [vmem:[%s1 + $0x20] sm:$0xff]
        %v239 = vld [vmem:[%s1 + $0x28] sm:$0xff]
        %v240 = vld [vmem:[%s1 + $0x30] sm:$0xff]
        %v241 = vld [vmem:[%s1 + $0x38] sm:$0xff]
        %v242 = vld [vmem:[%s1 + $0x40] sm:$0xff]
        %v243 = vld [vmem:[%s1 + $0x48] sm:$0xff]
        %v244 = vld [vmem:[%s1 + $0x50] sm:$0xff]
        %v245 = vld [vmem:[%s1 + $0x58] sm:$0xff]
        %v246 = vld [vmem:[%s1 + $0x60] sm:$0xff]
        %v247 = vld [vmem:[%s1 + $0x68] sm:$0xff]
        %v248 = vld [vmem:[%s1 + $0x70] sm:$0xff]
        %v249 = vld [vmem:[%s1 + $0x78] sm:$0xff]
        %v250 = vld [vmem:[%s1 + $0x80] sm:$0xff]
        %v251 = vld [vmem:[%s1 + $0x88] sm:$0xff]
        %v252 = vld [vmem:[%s1 + $0x90] sm:$0x7]
        %vm253 = vcmask 154624
        %v255 = vsel %vm253, %v187, 0
        %v258 = vsel %vm253, %v189, 0
        %v261 = vsel %vm253, %v191, 0
        %v264 = vsel %vm253, %v193, 0
        %v267 = vsel %vm253, %v195, 0
        %v270 = vsel %vm253, %v197, 0
        %v273 = vsel %vm253, %v199, 0
        %v276 = vsel %vm253, %v201, 0
        %v279 = vsel %vm253, %v203, 0
        %v282 = vsel %vm253, %v205, 0
        %v285 = vsel %vm253, %v207, 0
        %v288 = vsel %vm253, %v209, 0
        %v291 = vsel %vm253, %v211, 0
        %v294 = vsel %vm253, %v213, 0
        %v297 = vsel %vm253, %v215, 0
        %v300 = vsel %vm253, %v217, 0
        %v303 = vsel %vm253, %v219, 0
        %v306 = vsel %vm253, %v221, 0
        %v309 = vsel %vm253, %v223, 0
        %v312 = vsel %vm253, %v225, 0
        %v315 = vsel %vm253, %v227, 0
        %v318 = vsel %vm253, %v229, 0
        %v321 = vsel %vm253, %v231, 0
        %v324 = vsel %vm253, %v233, 0
        %vm326 = vcmask 1042432
        %v328 = vsel %vm326, %v252, 0
        %330 = vmatprep.subr.mxu0 0.0
        %331 = vmatpush1.msra.mxu0 %v234
        %332 = vmatprep.subr.mxu0 0.0
        %333 = vmatpush1.msra.mxu0 %v235
        %334 = vmatprep.subr.mxu0 0.0
        %335 = vmatpush1.msra.mxu0 %v236
        %336 = vmatprep.subr.mxu0 0.0
        %337 = vmatpush1.msra.mxu0 %v237
        %338 = vmatprep.subr.mxu0 0.0
        %339 = vmatpush1.msra.mxu0 %v238
        %340 = vmatprep.subr.mxu0 0.0
        %341 = vmatpush1.msra.mxu0 %v239
        %342 = vmatprep.subr.mxu0 0.0
        %343 = vmatpush1.msra.mxu0 %v240
        %344 = vmatprep.subr.mxu0 0.0
        %345 = vmatpush1.msra.mxu0 %v241
        %346 = vmatprep.subr.mxu0 0.0
        %347 = vmatpush1.msra.mxu0 %v242
        %348 = vmatprep.subr.mxu0 0.0
        %349 = vmatpush1.msra.mxu0 %v243
        %350 = vmatprep.subr.mxu0 0.0
        %351 = vmatpush1.msra.mxu0 %v244
        %352 = vmatprep.subr.mxu0 0.0
        %353 = vmatpush1.msra.mxu0 %v245
        %354 = vmatprep.subr.mxu0 0.0
        %355 = vmatpush1.msra.mxu0 %v246
        %356 = vmatprep.subr.mxu0 0.0
        %357 = vmatpush1.msra.mxu0 %v247
        %358 = vmatprep.subr.mxu0 0.0
        %359 = vmatpush1.msra.mxu0 %v248
        %360 = vmatprep.subr.mxu0 0.0
        %361 = vmatpush1.msra.mxu0 %v249
        %362 = vmatprep.subr.mxu0 0.0
        %363 = vmatpush1.msra.mxu0 %v250
        %364 = vmatprep.subr.mxu0 0.0
        %365 = vmatpush1.msra.mxu0 %v251
        %366 = vmatprep.subr.mxu0 0.0
        %367 = vmatpush1.msra.mxu0 %v328
        %368 = vmatprep.subr.mxu0 0.0
        %369 = vmatpush1.msra.mxu0 0.0
        %370 = vmatprep.subr.mxu0 0.0
        %371 = vmatpush1.msra.mxu0 0.0
        %372 = vmatprep.subr.mxu0 0.0
        %373 = vmatpush1.msra.mxu0 0.0
        %374 = vmatprep.subr.mxu0 0.0
        %375 = vmatpush1.msra.mxu0 0.0
        %376 = vmatprep.subr.mxu0 0.0
        %377 = vmatpush1.msra.mxu0 0.0
        %378 = vmatprep.subr.mxu0 0.0
        %379 = vmatpush1.msra.mxu0 0.0
        %380 = vmatprep.subr.mxu0 0.0
        %381 = vmatpush1.msra.mxu0 0.0
        %382 = vmatprep.subr.mxu0 0.0
        %383 = vmatpush1.msra.mxu0 0.0
        %384 = vmatprep.subr.mxu0 0.0
        %385 = vmatpush1.msra.mxu0 0.0
        %386 = vmatprep.subr.mxu0 0.0
        %387 = vmatpush1.msra.mxu0 0.0
        %388 = vmatprep.subr.mxu0 0.0
        %389 = vmatpush1.msra.mxu0 0.0
        %390 = vmatprep.subr.mxu0 0.0
        %391 = vmatpush1.msra.mxu0 0.0
        %392 = vmatprep.subr.mxu0 0.0
        %393 = vmatpush1.msra.mxu0 0.0
        %394 = vmatprep.mubr.f32.mxu0 %v255
        %395 = vmatmul.mubr.f32.gmra.mrb[0].mxu0 %v186
        %v396 = vpop.f32.mrb[0].mxu0
        %v397 = vadd.f32 0.0, %v396
        %v398 = vpop.f32.mrb[0].mxu0
        %399 = vmatprep.mubr.f32.mxu0 %v258
        %400 = vmatmul.mubr.f32.gmra.mrb[0].mxu0 %v188
        %v401 = vpop.f32.mrb[0].mxu0
        %v402 = vadd.f32 0.0, %v401
        %v403 = vpop.f32.mrb[0].mxu0
        %404 = vmatprep.mubr.f32.mxu0 %v261
        %405 = vmatmul.mubr.f32.gmra.mrb[0].mxu0 %v190
        %v406 = vpop.f32.mrb[0].mxu0
        %v407 = vadd.f32 0.0, %v406
        %v408 = vpop.f32.mrb[0].mxu0
        %409 = vmatprep.mubr.f32.mxu0 %v264
        %410 = vmatmul.mubr.f32.gmra.mrb[0].mxu0 %v192
        %v411 = vpop.f32.mrb[0].mxu0
        %v412 = vadd.f32 0.0, %v411
        %v413 = vpop.f32.mrb[0].mxu0
        %414 = vmatprep.mubr.f32.mxu0 %v267
        %415 = vmatmul.mubr.f32.gmra.mrb[0].mxu0 %v194
        %v416 = vpop.f32.mrb[0].mxu0
        %v417 = vadd.f32 0.0, %v416
        %v418 = vpop.f32.mrb[0].mxu0
        %419 = vmatprep.mubr.f32.mxu0 %v270
        %420 = vmatmul.mubr.f32.gmra.mrb[0].mxu0 %v196
        %v421 = vpop.f32.mrb[0].mxu0
        %v422 = vadd.f32 0.0, %v421
        %v423 = vpop.f32.mrb[0].mxu0
        %424 = vmatprep.mubr.f32.mxu0 %v273
        %425 = vmatmul.mubr.f32.gmra.mrb[0].mxu0 %v198
        %v426 = vpop.f32.mrb[0].mxu0
        %v427 = vadd.f32 0.0, %v426
        %v428 = vpop.f32.mrb[0].mxu0
        %429 = vmatprep.mubr.f32.mxu0 %v276
        %430 = vmatmul.mubr.f32.gmra.mrb[0].mxu0 %v200
        %v431 = vpop.f32.mrb[0].mxu0
        %v432 = vadd.f32 0.0, %v431
        %v433 = vpop.f32.mrb[0].mxu0
        %434 = vmatprep.mubr.f32.mxu0 %v279
        %435 = vmatmul.mubr.f32.gmra.mrb[0].mxu0 %v202
        %v436 = vpop.f32.mrb[0].mxu0
        %v437 = vadd.f32 0.0, %v436
        %v438 = vpop.f32.mrb[0].mxu0
        %439 = vmatprep.mubr.f32.mxu0 %v282
        %440 = vmatmul.mubr.f32.gmra.mrb[0].mxu0 %v204
        %v441 = vpop.f32.mrb[0].mxu0
        %v442 = vadd.f32 0.0, %v441
        %v443 = vpop.f32.mrb[0].mxu0
        %444 = vmatprep.mubr.f32.mxu0 %v285
        %445 = vmatmul.mubr.f32.gmra.mrb[0].mxu0 %v206
        %v446 = vpop.f32.mrb[0].mxu0
        %v447 = vadd.f32 0.0, %v446
        %v448 = vpop.f32.mrb[0].mxu0
        %449 = vmatprep.mubr.f32.mxu0 %v288
        %450 = vmatmul.mubr.f32.gmra.mrb[0].mxu0 %v208
        %v451 = vpop.f32.mrb[0].mxu0
        %v452 = vadd.f32 0.0, %v451
        %v453 = vpop.f32.mrb[0].mxu0
        %454 = vmatprep.mubr.f32.mxu0 %v291
        %455 = vmatmul.mubr.f32.gmra.mrb[0].mxu0 %v210
        %v456 = vpop.f32.mrb[0].mxu0
        %v457 = vadd.f32 0.0, %v456
        %v458 = vpop.f32.mrb[0].mxu0
        %459 = vmatprep.mubr.f32.mxu0 %v294
        %460 = vmatmul.mubr.f32.gmra.mrb[0].mxu0 %v212
        %v461 = vpop.f32.mrb[0].mxu0
        %v462 = vadd.f32 0.0, %v461
        %v463 = vpop.f32.mrb[0].mxu0
        %464 = vmatprep.mubr.f32.mxu0 %v297
        %465 = vmatmul.mubr.f32.gmra.mrb[0].mxu0 %v214
        %v466 = vpop.f32.mrb[0].mxu0
        %v467 = vadd.f32 0.0, %v466
        %v468 = vpop.f32.mrb[0].mxu0
        %469 = vmatprep.mubr.f32.mxu0 %v300
        %470 = vmatmul.mubr.f32.gmra.mrb[0].mxu0 %v216
        %v471 = vpop.f32.mrb[0].mxu0
        %v472 = vadd.f32 0.0, %v471
        %v473 = vpop.f32.mrb[0].mxu0
        %474 = vmatprep.mubr.f32.mxu0 %v303
        %475 = vmatmul.mubr.f32.gmra.mrb[0].mxu0 %v218
        %v476 = vpop.f32.mrb[0].mxu0
        %v477 = vadd.f32 0.0, %v476
        %v478 = vpop.f32.mrb[0].mxu0
        %479 = vmatprep.mubr.f32.mxu0 %v306
        %480 = vmatmul.mubr.f32.gmra.mrb[0].mxu0 %v220
        %v481 = vpop.f32.mrb[0].mxu0
        %v482 = vadd.f32 0.0, %v481
        %v483 = vpop.f32.mrb[0].mxu0
        %484 = vmatprep.mubr.f32.mxu0 %v309
        %485 = vmatmul.mubr.f32.gmra.mrb[0].mxu0 %v222
        %v486 = vpop.f32.mrb[0].mxu0
        %v487 = vadd.f32 0.0, %v486
        %v488 = vpop.f32.mrb[0].mxu0
        %489 = vmatprep.mubr.f32.mxu0 %v312
        %490 = vmatmul.mubr.f32.gmra.mrb[0].mxu0 %v224
        %v491 = vpop.f32.mrb[0].mxu0
        %v492 = vadd.f32 0.0, %v491
        %v493 = vpop.f32.mrb[0].mxu0
        %494 = vmatprep.mubr.f32.mxu0 %v315
        %495 = vmatmul.mubr.f32.gmra.mrb[0].mxu0 %v226
        %v496 = vpop.f32.mrb[0].mxu0
        %v497 = vadd.f32 0.0, %v496
        %v498 = vpop.f32.mrb[0].mxu0
        %499 = vmatprep.mubr.f32.mxu0 %v318
        %500 = vmatmul.mubr.f32.gmra.mrb[0].mxu0 %v228
        %v501 = vpop.f32.mrb[0].mxu0
        %v502 = vadd.f32 0.0, %v501
        %v503 = vpop.f32.mrb[0].mxu0
        %504 = vmatprep.mubr.f32.mxu0 %v321
        %505 = vmatmul.mubr.f32.gmra.mrb[0].mxu0 %v230
        %v506 = vpop.f32.mrb[0].mxu0
        %v507 = vadd.f32 0.0, %v506
        %v508 = vpop.f32.mrb[0].mxu0
        %509 = vmatprep.mubr.f32.mxu0 %v324
        %510 = vmatmul.mubr.f32.gmra.mrb[0].mxu0 %v232
        %v511 = vpop.f32.mrb[0].mxu0
        %v512 = vadd.f32 0.0, %v511
        %v513 = vpop.f32.mrb[0].mxu0
        %514 = vdwg.mxu0
        %515 = vst [vmem:[%s170] sm:$0xff] %v397
        %516 = vst [vmem:[%s170 + $0x8] sm:$0xff] %v402
        %517 = vst [vmem:[%s170 + $0x10] sm:$0xff] %v407
        %518 = vst [vmem:[%s170 + $0x18] sm:$0xff] %v412
        %519 = vst [vmem:[%s170 + $0x20] sm:$0xff] %v417
        %520 = vst [vmem:[%s170 + $0x28] sm:$0xff] %v422
        %521 = vst [vmem:[%s170 + $0x30] sm:$0xff] %v427
        %522 = vst [vmem:[%s170 + $0x38] sm:$0xff] %v432
        %523 = vst [vmem:[%s170 + $0x40] sm:$0xff] %v437
        %524 = vst [vmem:[%s170 + $0x48] sm:$0xff] %v442
        %525 = vst [vmem:[%s170 + $0x50] sm:$0xff] %v447
        %526 = vst [vmem:[%s170 + $0x58] sm:$0xff] %v452
        %527 = vst [vmem:[%s170 + $0x60] sm:$0xff] %v457
        %528 = vst [vmem:[%s170 + $0x68] sm:$0xff] %v462
        %529 = vst [vmem:[%s170 + $0x70] sm:$0xff] %v467
        %530 = vst [vmem:[%s170 + $0x78] sm:$0xff] %v472
        %531 = vst [vmem:[%s170 + $0x80] sm:$0xff] %v477
        %532 = vst [vmem:[%s170 + $0x88] sm:$0xff] %v482
        %533 = vst [vmem:[%s170 + $0x90] sm:$0xff] %v487
        %534 = vst [vmem:[%s170 + $0x98] sm:$0xff] %v492
        %535 = vst [vmem:[%s170 + $0xa0] sm:$0xff] %v497
        %536 = vst [vmem:[%s170 + $0xa8] sm:$0xff] %v502
        %537 = vst [vmem:[%s170 + $0xb0] sm:$0xff] %v507
        %538 = vst [vmem:[%s170 + $0xb8] sm:$0xff] %v512
        %v539 = vadd.f32 %v397, %v402
        %v540 = vadd.f32 %v539, %v407
        %v541 = vadd.f32 %v540, %v412
        %v542 = vadd.f32 %v541, %v417
        %v543 = vadd.f32 %v542, %v422
        %v544 = vadd.f32 %v543, %v427
        %v545 = vadd.f32 %v544, %v432
        %v546 = vadd.f32 %v545, %v437
        %v547 = vadd.f32 %v546, %v442
        %v548 = vadd.f32 %v547, %v447
        %v549 = vadd.f32 %v548, %v452
        %v550 = vadd.f32 %v549, %v457
        %v551 = vadd.f32 %v550, %v462
        %v552 = vadd.f32 %v551, %v467
        %v553 = vadd.f32 %v552, %v472
        %v554 = vadd.f32 %v553, %v477
        %v555 = vadd.f32 %v554, %v482
        %v556 = vadd.f32 %v555, %v487
        %v557 = vadd.f32 %v556, %v492
        %v558 = vadd.f32 %v557, %v497
        %v559 = vadd.f32 %v558, %v502
        %v560 = vadd.f32 %v559, %v507
        %v561 = vadd.f32 %v560, %v512
        %v562 = vrot.slane %v561, 4
        %v563 = vadd.f32 %v561, %v562
        %v564 = vrot.slane %v563, 2
        %v565 = vadd.f32 %v563, %v564
        %v566 = vrot.slane %v565, 1
        %v567 = vadd.f32 %v565, %v566
        %568 = vst [vmem:[%s177] sm:$0x1] %v567
        %v569 = vmul.f32 %v397, %v397
        %v570 = vmul.f32 %v402, %v402
        %v571 = vmul.f32 %v407, %v407
        %v572 = vmul.f32 %v412, %v412
        %v573 = vmul.f32 %v417, %v417
        %v574 = vmul.f32 %v422, %v422
        %v575 = vmul.f32 %v427, %v427
        %v576 = vmul.f32 %v432, %v432
        %v577 = vmul.f32 %v437, %v437
        %v578 = vmul.f32 %v442, %v442
        %v579 = vmul.f32 %v447, %v447
        %v580 = vmul.f32 %v452, %v452
        %v581 = vmul.f32 %v457, %v457
        %v582 = vmul.f32 %v462, %v462
        %v583 = vmul.f32 %v467, %v467
        %v584 = vmul.f32 %v472, %v472
        %v585 = vmul.f32 %v477, %v477
        %v586 = vmul.f32 %v482, %v482
        %v587 = vmul.f32 %v487, %v487
        %v588 = vmul.f32 %v492, %v492
        %v589 = vmul.f32 %v497, %v497
        %v590 = vmul.f32 %v502, %v502
        %v591 = vmul.f32 %v507, %v507
        %v592 = vmul.f32 %v512, %v512
        %v593 = vadd.f32 %v569, %v570
        %v594 = vadd.f32 %v593, %v571
        %v595 = vadd.f32 %v594, %v572
        %v596 = vadd.f32 %v595, %v573
        %v597 = vadd.f32 %v596, %v574
        %v598 = vadd.f32 %v597, %v575
        %v599 = vadd.f32 %v598, %v576
        %v600 = vadd.f32 %v599, %v577
        %v601 = vadd.f32 %v600, %v578
        %v602 = vadd.f32 %v601, %v579
        %v603 = vadd.f32 %v602, %v580
        %v604 = vadd.f32 %v603, %v581
        %v605 = vadd.f32 %v604, %v582
        %v606 = vadd.f32 %v605, %v583
        %v607 = vadd.f32 %v606, %v584
        %v608 = vadd.f32 %v607, %v585
        %v609 = vadd.f32 %v608, %v586
        %v610 = vadd.f32 %v609, %v587
        %v611 = vadd.f32 %v610, %v588
        %v612 = vadd.f32 %v611, %v589
        %v613 = vadd.f32 %v612, %v590
        %v614 = vadd.f32 %v613, %v591
        %v615 = vadd.f32 %v614, %v592
        %v616 = vrot.slane %v615, 4
        %v617 = vadd.f32 %v615, %v616
        %v618 = vrot.slane %v617, 2
        %v619 = vadd.f32 %v617, %v618
        %v620 = vrot.slane %v619, 1
        %v621 = vadd.f32 %v619, %v620
        %622 = vst [vmem:[%s177 + $0x1] sm:$0x1] %v621
        %623 = vst [vmem:[%s177 + $0x2] sm:$0x3f] 0.0
        %s624 = sand.u32 %s76, 1
        %s625 = scalar_lea.sflag [#allocation3], %s624
        %s626 = sand.u32 %s76, 1
        %s627 = smul.addr %s626, 192
        %s628 = scalar_lea.vmem [#allocation2], %s627
        %s629 = sand.u32 %s102, 1
        %s630 = scalar_lea.sflag [#allocation5], %s629
        %s631 = sand.u32 %s102, 1
        %s632 = smul.addr %s631, 8
        %s633 = scalar_lea.vmem [#allocation4], %s632
        // Predicated region
        $region29: #{tpu_custom_call.1} parent=27 // pred_check
          %p634 = pneg %p86
        $region30: #{tpu_custom_call.1} parent=27 // pred_check_branch
          %636 = sbr.rel (%p634) target = $region32
        $region31: #{tpu_custom_call.1} parent=27 // pred_region
          %s637 = smul.u32 24, %s21
          %s639 = ssub.s32 3072, 3072
          %640 = vsyncadd %s625, %s639
          %s641 = smul.addr %s637, 128
          %s642 = scalar_lea.hbm %s2, %s641
          %s643 = sshll.u32 %s628, 4
          %s644 = int_to_ptr.vmem [resolvable:$true] %s643
          %649 = dma.vmem_to_hbm [thread:$0]  %s644, 3072, %s642, %s625, 128, 128, 8
        $region32: #{tpu_custom_call.1} parent=27 // pred_fallthru
          _
        // Predicated region
        $region33: #{tpu_custom_call.1} parent=27 // pred_check
          %p650 = pneg %p112
        $region34: #{tpu_custom_call.1} parent=27 // pred_check_branch
          %652 = sbr.rel (%p650) target = $region36
        $region35: #{tpu_custom_call.1} parent=27 // pred_region
          %s654 = ssub.s32 128, 128
          %655 = vsyncadd %s630, %s654
          %s656 = smul.addr %s21, 128
          %s657 = scalar_lea.hbm %s3, %s656
          %s659 = sshll.u32 %s633, 4
          %s660 = int_to_ptr.vmem [resolvable:$true] %s659
          %662 = dma.vmem_to_hbm [thread:$0]  %s660, 128, %s657, %s630
        $region36: #{tpu_custom_call.1} parent=27 // pred_fallthru
          _
      $region28: #{tpu_custom_call.1} parent=5 // pred_fallthru
        _
      %p663 = scmp.le.s32.totalorder 2, %s16
      // Predicated region
      $region37: #{tpu_custom_call.1} parent=5 // pred_check
        %p664 = pneg %p663
      $region38: #{tpu_custom_call.1} parent=5 // pred_check_branch
        %666 = sbr.rel (%p664) target = $region40
      $region39: #{tpu_custom_call.1} parent=5 // pred_region
        %s667 = ssub.s32 %s16, 2
        // Predicated region
        $region41: #{tpu_custom_call.1} parent=39 // pred_check
          %p668 = pneg %p92
        $region42: #{tpu_custom_call.1} parent=39 // pred_check_branch
          %670 = sbr.rel (%p668) target = $region44
        $region43: #{tpu_custom_call.1} parent=39 // pred_region
          %s671 = sand.u32 %s77, 1
          %s672 = scalar_lea.sflag [#allocation3], %s671
          %s673 = sand.u32 %s77, 1
          %s674 = smul.addr %s673, 192
          %s675 = scalar_lea.vmem [#allocation2], %s674
          %676 = dma.done %s672, 3072
        $region44: #{tpu_custom_call.1} parent=39 // pred_fallthru
          _
        // Predicated region
        $region45: #{tpu_custom_call.1} parent=39 // pred_check
          %p677 = pneg %p118
        $region46: #{tpu_custom_call.1} parent=39 // pred_check_branch
          %679 = sbr.rel (%p677) target = $region48
        $region47: #{tpu_custom_call.1} parent=39 // pred_region
          %s680 = sand.u32 %s103, 1
          %s681 = scalar_lea.sflag [#allocation5], %s680
          %s682 = sand.u32 %s103, 1
          %s683 = smul.addr %s682, 8
          %s684 = scalar_lea.vmem [#allocation4], %s683
          %685 = dma.done %s681, 128
        $region48: #{tpu_custom_call.1} parent=39 // pred_fallthru
          _
      $region40: #{tpu_custom_call.1} parent=5 // pred_fallthru
        _
    $region6: #{tpu_custom_call.1} parent=1 // loop_footer
      %s20 = sadd.s32 1, %s16
    $region7: #{tpu_custom_call.1} parent=1 // loop_footer_branch
      %15 = sbr.rel target = $region3
    $region8: #{tpu_custom_call.1} parent=1 // loop_exit
      _
    %686 = vsyncpa [#allocation3], 1
    %s687 = scalar_lea.sflag [#allocation3], 1
    %688 = vsyncpa %s687, 1
    %689 = vsyncpa [#allocation5], 1
    %s690 = scalar_lea.sflag [#allocation5], 1
    %691 = vsyncpa %s690, 1

</llo_original>
